<compile_context>
chip_gen: v5e
topology: v5e:2x2
jax: 0.10.0
libtpu: 0.0.40
codegen_flags: <defaults>
</compile_context>

<pallas_src>
import functools

import jax
import jax.numpy as jnp
from jax.experimental import pallas as pl
from jax.experimental.pallas import tpu as pltpu


# ----------------------------------------------------------------------------
# Kernel 1: fused 3-channel spectral propagation over all snapshots
#   spec[t] = sum_k theta_expand[k] * P_t^k (X_t @ [W1|W2|Wa])
#   g[t]    = spec[t] @ W_ih3 + b_cat       (LSTM input projection, hoisted)
# ----------------------------------------------------------------------------
def _spectral_kernel(theta_ref, p_ref, x_ref, w_ref, wih_ref, b_ref,
                     spec_ref, g_ref, *, K, mxu_dtype):
    z = jnp.dot(x_ref[0], w_ref[...], preferred_element_type=jnp.float32)
    acc = theta_ref[0:1, :] * z
    p = p_ref[0]
    for k in range(1, K + 1):
        z = jnp.dot(p, z.astype(mxu_dtype), preferred_element_type=jnp.float32)
        acc = acc + theta_ref[k:k + 1, :] * z
    spec_ref[0] = acc
    g_ref[0] = (
        jnp.dot(acc.astype(mxu_dtype), wih_ref[...],
                preferred_element_type=jnp.float32)
        + b_ref[...]
    )


def spectral_all(theta_expand, p_seq, x_seq, w_cat, w_ih3, b_cat, *,
                 K, mxu_dtype=jnp.bfloat16):
    T, N, F = x_seq.shape
    D3 = w_cat.shape[1]
    H8 = w_ih3.shape[1]
    p_seq = p_seq.astype(mxu_dtype)
    x_seq = x_seq.astype(mxu_dtype)
    w_cat = w_cat.astype(mxu_dtype)
    w_ih3 = w_ih3.astype(mxu_dtype)
    return pl.pallas_call(
        functools.partial(_spectral_kernel, K=K, mxu_dtype=mxu_dtype),
        out_shape=(jax.ShapeDtypeStruct((T, N, D3), jnp.float32),
                   jax.ShapeDtypeStruct((T, N, H8), jnp.float32)),
        grid=(T,),
        in_specs=[
            pl.BlockSpec((K + 1, D3), lambda t: (0, 0)),   # theta_expand
            pl.BlockSpec((1, N, N), lambda t: (t, 0, 0)),  # P_t
            pl.BlockSpec((1, N, F), lambda t: (t, 0, 0)),  # X_t
            pl.BlockSpec((F, D3), lambda t: (0, 0)),       # [W1|W2|Wa]
            pl.BlockSpec((D3, H8), lambda t: (0, 0)),      # fused LSTM W_ih
            pl.BlockSpec((1, H8), lambda t: (0, 0)),       # fused LSTM bias
        ],
        out_specs=[
            pl.BlockSpec((1, N, D3), lambda t: (t, 0, 0)),
            pl.BlockSpec((1, N, H8), lambda t: (t, 0, 0)),
        ],
        compiler_params=pltpu.CompilerParams(
            dimension_semantics=("parallel",),
            vmem_limit_bytes=64 * 1024 * 1024,
        ),
    )(theta_expand, p_seq, x_seq, w_cat, w_ih3, b_cat)


# ----------------------------------------------------------------------------
# Kernel 2: fused InfoNCE contrastive loss, accumulated over snapshots
#   (both channels vs the anchor view; diag positives; one-directional)
# ----------------------------------------------------------------------------
def _nce_kernel(spec_ref, out_ref, acc_sc, *, D, inv_temp, interval, n_terms):
    t = pl.program_id(0)

    @pl.when(t == 0)
    def _():
        acc_sc[...] = jnp.zeros_like(acc_sc)

    @pl.when(t % interval == 0)
    def _():
        z = spec_ref[0]
        z1 = z[:, 0:D]
        z2 = z[:, D:2 * D]
        za = z[:, 2 * D:3 * D]

        def normalize(v):
            return v * jax.lax.rsqrt(
                jnp.sum(v * v, axis=-1, keepdims=True) + 1e-12)

        z1n, z2n, zan = normalize(z1), normalize(z2), normalize(za)

        def nce(a, b):
            # A @ B^T without an explicit transpose (contract last dims).
            sim = jax.lax.dot_general(
                a, b, (((1,), (1,)), ((), ())),
                preferred_element_type=jnp.float32) * inv_temp
            m = jnp.max(sim, axis=-1, keepdims=True)
            lse = jnp.log(jnp.sum(jnp.exp(sim - m), axis=-1,
                                  keepdims=True)) + m
            rows = jax.lax.broadcasted_iota(jnp.int32, sim.shape, 0)
            cols = jax.lax.broadcasted_iota(jnp.int32, sim.shape, 1)
            diag = jnp.sum(jnp.where(rows == cols, sim, 0.0), axis=-1,
                           keepdims=True)
            return jnp.mean(lse - diag)

        loss = 0.5 * (nce(z1n, zan) + nce(z2n, zan))
        acc_sc[...] += jnp.reshape(loss, (1, 1))

    @pl.when(t == pl.num_programs(0) - 1)
    def _():
        out_ref[...] = acc_sc[...] * (1.0 / n_terms)


def contrastive_all(spec_seq, *, D, temperature, interval):
    T, N, D3 = spec_seq.shape
    n_terms = len(range(0, T, interval))
    return pl.pallas_call(
        functools.partial(_nce_kernel, D=D, inv_temp=1.0 / temperature,
                          interval=interval, n_terms=n_terms),
        out_shape=jax.ShapeDtypeStruct((1, 1), jnp.float32),
        grid=(T,),
        in_specs=[pl.BlockSpec((1, N, D3), lambda t: (t, 0, 0))],
        out_specs=pl.BlockSpec((1, 1), lambda t: (0, 0)),
        scratch_shapes=[pltpu.VMEM((1, 1), jnp.float32)],
        compiler_params=pltpu.CompilerParams(
            dimension_semantics=("arbitrary",)),
    )(spec_seq)


# ----------------------------------------------------------------------------
# Kernel 3: fused dual-channel LSTM recurrence (input projection precomputed)
#   gate columns are gate-major / channel-minor: [i1 i2 | f1 f2 | g1 g2 | o1 o2]
#   hidden/cell state layout: [h1 | h2]  -> output == concat of both channels
# ----------------------------------------------------------------------------
def _lstm_kernel(g_ref, whh_ref, out_ref, h_sc, c_sc, *, H2):
    t = pl.program_id(0)

    @pl.when(t == 0)
    def _():
        h_sc[...] = jnp.zeros_like(h_sc)
        c_sc[...] = jnp.zeros_like(c_sc)

    gates = g_ref[0] + jnp.dot(h_sc[...], whh_ref[...],
                               preferred_element_type=jnp.float32)
    i_g = jax.nn.sigmoid(gates[:, 0 * H2:1 * H2])
    f_g = jax.nn.sigmoid(gates[:, 1 * H2:2 * H2])
    g_g = jnp.tanh(gates[:, 2 * H2:3 * H2])
    o_g = jax.nn.sigmoid(gates[:, 3 * H2:4 * H2])
    c_new = f_g * c_sc[...] + i_g * g_g
    h_new = o_g * jnp.tanh(c_new)
    c_sc[...] = c_new
    h_sc[...] = h_new

    @pl.when(t == pl.num_programs(0) - 1)
    def _():
        out_ref[...] = h_new  # only write the resident output block once


def lstm_fused_last_hidden(g_seq, w_hh_cat):
    T, N, H8 = g_seq.shape
    H2 = w_hh_cat.shape[0]
    return pl.pallas_call(
        functools.partial(_lstm_kernel, H2=H2),
        out_shape=jax.ShapeDtypeStruct((N, H2), jnp.float32),
        grid=(T,),
        in_specs=[
            pl.BlockSpec((1, N, H8), lambda t: (t, 0, 0)),
            pl.BlockSpec((H2, H8), lambda t: (0, 0)),
        ],
        out_specs=pl.BlockSpec((N, H2), lambda t: (0, 0)),
        scratch_shapes=[pltpu.VMEM((N, H2), jnp.float32),
                        pltpu.VMEM((N, H2), jnp.float32)],
        compiler_params=pltpu.CompilerParams(
            dimension_semantics=("arbitrary",)),
    )(g_seq, w_hh_cat)


# ----------------------------------------------------------------------------
# Kernel 4: link-predictor head with fused endpoint gather
#   h_u / h_v gathered via one-hot matmuls (MXU); 2nd layer = VPU reduction
# ----------------------------------------------------------------------------
def _head_kernel(edges_ref, reps_ref, w1u_ref, w1v_ref, b1_ref, w2_ref, b2_ref,
                 out_ref, *, N):
    E = edges_ref.shape[0]
    node_ids = jax.lax.broadcasted_iota(jnp.int32, (E, N), 1)
    u = edges_ref[:, 0:1]
    v = edges_ref[:, 1:2]
    onehot_u = (node_ids == u).astype(jnp.float32)
    onehot_v = (node_ids == v).astype(jnp.float32)
    reps = reps_ref[...]
    h_u = jnp.dot(onehot_u, reps, preferred_element_type=jnp.float32)
    h_v = jnp.dot(onehot_v, reps, preferred_element_type=jnp.float32)
    h = (jnp.dot(h_u, w1u_ref[...], preferred_element_type=jnp.float32)
         + jnp.dot(h_v, w1v_ref[...], preferred_element_type=jnp.float32)
         + b1_ref[...])
    h = jnp.maximum(h, 0.0)
    out_ref[...] = jnp.sum(h * w2_ref[...], axis=-1, keepdims=True) + b2_ref[...]


def link_head_fused(node_reps, edges, w1_u, w1_v, b1, w2_row, b2):
    N, D2 = node_reps.shape
    E = edges.shape[0]
    Hid = w1_u.shape[1]
    return pl.pallas_call(
        functools.partial(_head_kernel, N=N),
        out_shape=jax.ShapeDtypeStruct((E, 1), jnp.float32),
        grid=(1,),
        in_specs=[
            pl.BlockSpec((E, 2), lambda i: (0, 0)),
            pl.BlockSpec((N, D2), lambda i: (0, 0)),
            pl.BlockSpec((D2, Hid), lambda i: (0, 0)),
            pl.BlockSpec((D2, Hid), lambda i: (0, 0)),
            pl.BlockSpec((1, Hid), lambda i: (0, 0)),
            pl.BlockSpec((1, Hid), lambda i: (0, 0)),
            pl.BlockSpec((1, 1), lambda i: (0, 0)),
        ],
        out_specs=pl.BlockSpec((E, 1), lambda i: (0, 0)),
        compiler_params=pltpu.CompilerParams(
            dimension_semantics=("parallel",)),
    )(edges, node_reps, w1_u, w1_v, b1, w2_row, b2)


# ----------------------------------------------------------------------------
# Parameter preparation (pure JAX glue, runs once)
# ----------------------------------------------------------------------------
def make_theta(h_hat, h_hat_prime, K):
    k = jnp.arange(K + 1, dtype=jnp.float32)
    theta = 0.5 * (jnp.exp(-h_hat * k) + jnp.exp(-h_hat_prime * k))
    return (theta / jnp.sum(theta)).astype(jnp.float32)


def prepare_fused_params(params, D, H, K):
    # per-channel theta -> lane-aligned (K+1, 3D) coefficient table
    theta_cat = jnp.stack([params["theta_ch1"], params["theta_ch2"],
                           params["theta_anc"]], axis=0)          # (3, K+1)
    theta_expand = jnp.repeat(theta_cat.T, D, axis=1)             # (K+1, 3D)

    w_cat = jnp.concatenate([params["W_ch1"], params["W_ch2"],
                             params["W_anc"]], axis=1)            # (F, 3D)

    def gate_chunks(w):  # split (R, 4H) columns into the i, f, g, o blocks
        return [w[:, g * H:(g + 1) * H] for g in range(4)]

    # fused input projection: (3D, 8H), gate-major / channel-minor columns,
    # anchor rows zero (anchor channel does not feed the LSTMs)
    g1_ih, g2_ih = gate_chunks(params["lstm1_wih"]), gate_chunks(params["lstm2_wih"])
    zD = jnp.zeros((D, H), jnp.float32)
    cols = []
    for g in range(4):
        cols.append(jnp.concatenate([g1_ih[g], zD, zD], axis=0))
        cols.append(jnp.concatenate([zD, g2_ih[g], zD], axis=0))
    w_ih3 = jnp.concatenate(cols, axis=1)                         # (3D, 8H)

    # fused recurrent weights: block-diagonal (2H, 8H)
    g1_hh, g2_hh = gate_chunks(params["lstm1_whh"]), gate_chunks(params["lstm2_whh"])
    zH = jnp.zeros((H, H), jnp.float32)
    cols = []
    for g in range(4):
        cols.append(jnp.concatenate([g1_hh[g], zH], axis=0))
        cols.append(jnp.concatenate([zH, g2_hh[g]], axis=0))
    w_hh_cat = jnp.concatenate(cols, axis=1)                      # (2H, 8H)

    b1g, b2g = gate_chunks(params["lstm1_b"]), gate_chunks(params["lstm2_b"])
    b_cat = jnp.concatenate(
        [blk for g in range(4) for blk in (b1g[g], b2g[g])], axis=1)  # (1, 8H)

    w1 = params["head_w1"]                                        # (4H, Hid)
    return dict(
        theta_expand=theta_expand, w_cat=w_cat, w_ih3=w_ih3,
        w_hh_cat=w_hh_cat, b_cat=b_cat,
        head_w1u=w1[:2 * H], head_w1v=w1[2 * H:],
        head_b1=params["head_b1"],
        head_w2=params["head_w2"].T,                              # (1, Hid)
        head_b2=params["head_b2"],
    )


# ----------------------------------------------------------------------------
# Full forward
# ----------------------------------------------------------------------------
def dyn_spectral_forward(params, features_seq, p_seq, target_edges,
                         contrastive_temperature=0.1,
                         contrastive_loss_interval=1,
                         mxu_dtype=jnp.bfloat16):
    K = params["theta_ch1"].shape[0] - 1
    D = params["W_ch1"].shape[1]
    H = params["lstm1_whh"].shape[0]

    fused = prepare_fused_params(params, D, H, K)

    # 1) all snapshots, all three channels + LSTM input projection, one call
    spec_seq, g_seq = spectral_all(
        fused["theta_expand"], p_seq, features_seq,
        fused["w_cat"], fused["w_ih3"], fused["b_cat"],
        K=K, mxu_dtype=mxu_dtype)

    # 2) contrastive loss (both channels vs anchor), one call, accumulated
    contrastive_loss = jnp.squeeze(
        contrastive_all(spec_seq, D=D,
                        temperature=contrastive_temperature,
                        interval=contrastive_loss_interval))

    # 3) fused dual-channel LSTM -> node reps = [h1 | h2]  (N, 2H)
    node_reps = lstm_fused_last_hidden(g_seq, fused["w_hh_cat"])

    # 4) link predictor head with fused endpoint gather
    edges = target_edges.T.astype(jnp.int32)                      # (E, 2)
    logits = link_head_fused(node_reps, edges,
                             fused["head_w1u"], fused["head_w1v"],
                             fused["head_b1"], fused["head_w2"],
                             fused["head_b2"])
    return jnp.squeeze(logits, axis=-1), contrastive_loss


def init_params(key, F, D, H, K, head_hidden,
                h1=0.5, h1p=0.8, h2=1.0, h2p=1.3, ha=0.7):
    ks = jax.random.split(key, 12)

    def glorot(k, shape):
        fan_in, fan_out = shape[0], shape[-1]
        lim = (6.0 / (fan_in + fan_out)) ** 0.5
        return jax.random.uniform(k, shape, jnp.float32, -lim, lim)

    return {
        "theta_ch1": make_theta(h1, h1p, K),
        "theta_ch2": make_theta(h2, h2p, K),
        "theta_anc": make_theta(ha, ha, K),
        "W_ch1": glorot(ks[0], (F, D)),
        "W_ch2": glorot(ks[1], (F, D)),
        "W_anc": glorot(ks[2], (F, D)),
        "lstm1_wih": glorot(ks[3], (D, 4 * H)),
        "lstm1_whh": glorot(ks[4], (H, 4 * H)),
        "lstm1_b": jnp.zeros((1, 4 * H), jnp.float32),
        "lstm2_wih": glorot(ks[5], (D, 4 * H)),
        "lstm2_whh": glorot(ks[6], (H, 4 * H)),
        "lstm2_b": jnp.zeros((1, 4 * H), jnp.float32),
        "head_w1": glorot(ks[7], (4 * H, head_hidden)),
        "head_b1": jnp.zeros((1, head_hidden), jnp.float32),
        "head_w2": glorot(ks[8], (head_hidden, 1)),
        "head_b2": jnp.zeros((1, 1), jnp.float32),
    }


if __name__ == "__main__":
    # small, module-consistent shapes
    T = 4            # number of snapshots
    N = 16           # nodes per snapshot
    F = 8            # initial_feature_dim
    K = 3            # polynomial order
    D = 32           # spectral channel embedding dim (LSTM input)
    H = 16           # lstm_hidden_dim -> node reps dim = 2*H = 32, gates 8H=128
    HEAD_HIDDEN = 16  # link_pred_hidden_dim
    E = 6            # number of target edges

    key = jax.random.PRNGKey(0)
    k_par, k_x, k_p, k_e = jax.random.split(key, 4)

    params = init_params(k_par, F, D, H, K, HEAD_HIDDEN)

    features_seq = jax.random.normal(k_x, (T, N, F), jnp.float32)

    # symmetric row-normalized propagation matrices P_t
    A = jax.random.uniform(k_p, (T, N, N), jnp.float32)
    A = 0.5 * (A + jnp.swapaxes(A, -1, -2))
    A = (A > 0.6).astype(jnp.float32) + jnp.eye(N)[None]
    deg = jnp.sum(A, axis=-1, keepdims=True)
    p_seq = A / jnp.maximum(deg, 1.0)

    target_edges = jax.random.randint(k_e, (2, E), 0, N, dtype=jnp.int32)

    logits, cl_loss = dyn_spectral_forward(
        params, features_seq, p_seq, target_edges,
        contrastive_temperature=0.1, contrastive_loss_interval=1,
        mxu_dtype=jnp.bfloat16)

    jax.block_until_ready((logits, cl_loss))
    assert logits.shape == (E,)
    assert cl_loss.shape == ()
    print("KERNEL_OK")
</pallas_src>

<mosaic_0001>
module attributes {stable_mosaic.version = 11 : i64} {
  func.func @_spectral_kernel(%arg0: i32, %arg1: memref<4x96xf32, #tpu.memory_space<vmem>>, %arg2: memref<1x16x16xbf16, #tpu.memory_space<vmem>>, %arg3: memref<1x16x8xbf16, #tpu.memory_space<vmem>>, %arg4: memref<8x96xbf16, #tpu.memory_space<vmem>>, %arg5: memref<96x128xbf16, #tpu.memory_space<vmem>>, %arg6: memref<1x128xf32, #tpu.memory_space<vmem>>, %arg7: memref<1x16x96xf32, #tpu.memory_space<vmem>>, %arg8: memref<1x16x128xf32, #tpu.memory_space<vmem>>) attributes {dimension_semantics = [#tpu.dimension_semantics<parallel>], iteration_bounds = array<i64: 4>, scalar_prefetch = 0 : i64, scratch_operands = 0 : i64, tpu.core_type = #tpu.core_type<tc>, window_params = [{pipeline_mode = #tpu.pipeline_mode<synchronous>, transform_indices = @transform_0, window_bounds = array<i64: 4, 96>}, {transform_indices = @transform_1, window_bounds = array<i64: 1, 16, 16>}, {transform_indices = @transform_2, window_bounds = array<i64: 1, 16, 8>}, {pipeline_mode = #tpu.pipeline_mode<synchronous>, transform_indices = @transform_3, window_bounds = array<i64: 8, 96>}, {pipeline_mode = #tpu.pipeline_mode<synchronous>, transform_indices = @transform_4, window_bounds = array<i64: 96, 128>}, {pipeline_mode = #tpu.pipeline_mode<synchronous>, transform_indices = @transform_5, window_bounds = array<i64: 1, 128>}, {transform_indices = @transform_6, window_bounds = array<i64: 1, 16, 96>}, {transform_indices = @transform_7, window_bounds = array<i64: 1, 16, 128>}]} {
    %c0 = arith.constant 0 : index
    %c0_0 = arith.constant 0 : index
    %c0_1 = arith.constant 0 : index
    %0 = vector.load %arg3[%c0, %c0_0, %c0_1] : memref<1x16x8xbf16, #tpu.memory_space<vmem>>, vector<1x16x8xbf16>
    %1 = vector.shape_cast %0 : vector<1x16x8xbf16> to vector<16x8xbf16>
    %c0_2 = arith.constant 0 : index
    %c0_3 = arith.constant 0 : index
    %2 = vector.load %arg4[%c0_2, %c0_3] : memref<8x96xbf16, #tpu.memory_space<vmem>>, vector<8x96xbf16>
    %cst = arith.constant dense<0.000000e+00> : vector<16x96xf32>
    %3 = tpu.matmul %1, %2, %cst {dimension_numbers = #tpu.dot_dimension_numbers<[1], [0], [0], [1], [0, 0, 1, 1], [], []>} : vector<16x8xbf16>, vector<8x96xbf16>, vector<16x96xf32> -> vector<16x96xf32>
    %c0_4 = arith.constant 0 : index
    %c0_5 = arith.constant 0 : index
    %4 = vector.load %arg1[%c0_4, %c0_5] : memref<4x96xf32, #tpu.memory_space<vmem>>, vector<1x96xf32>
    %5 = vector.broadcast %4 : vector<1x96xf32> to vector<16x96xf32>
    %6 = arith.mulf %5, %3 : vector<16x96xf32>
    %c0_6 = arith.constant 0 : index
    %c0_7 = arith.constant 0 : index
    %c0_8 = arith.constant 0 : index
    %7 = vector.load %arg2[%c0_6, %c0_7, %c0_8] : memref<1x16x16xbf16, #tpu.memory_space<vmem>>, vector<1x16x16xbf16>
    %8 = vector.shape_cast %7 : vector<1x16x16xbf16> to vector<16x16xbf16>
    %9 = arith.truncf %3 : vector<16x96xf32> to vector<16x96xbf16>
    %cst_9 = arith.constant dense<0.000000e+00> : vector<16x96xf32>
    %10 = tpu.matmul %8, %9, %cst_9 {dimension_numbers = #tpu.dot_dimension_numbers<[1], [0], [0], [1], [0, 0, 1, 1], [], []>} : vector<16x16xbf16>, vector<16x96xbf16>, vector<16x96xf32> -> vector<16x96xf32>
    %c1 = arith.constant 1 : index
    %c0_10 = arith.constant 0 : index
    %11 = vector.load %arg1[%c1, %c0_10] : memref<4x96xf32, #tpu.memory_space<vmem>>, vector<1x96xf32>
    %12 = vector.broadcast %11 : vector<1x96xf32> to vector<16x96xf32>
    %13 = arith.mulf %12, %10 : vector<16x96xf32>
    %14 = arith.addf %6, %13 : vector<16x96xf32>
    %15 = arith.truncf %10 : vector<16x96xf32> to vector<16x96xbf16>
    %cst_11 = arith.constant dense<0.000000e+00> : vector<16x96xf32>
    %16 = tpu.matmul %8, %15, %cst_11 {dimension_numbers = #tpu.dot_dimension_numbers<[1], [0], [0], [1], [0, 0, 1, 1], [], []>} : vector<16x16xbf16>, vector<16x96xbf16>, vector<16x96xf32> -> vector<16x96xf32>
    %c2 = arith.constant 2 : index
    %c0_12 = arith.constant 0 : index
    %17 = vector.load %arg1[%c2, %c0_12] : memref<4x96xf32, #tpu.memory_space<vmem>>, vector<1x96xf32>
    %18 = vector.broadcast %17 : vector<1x96xf32> to vector<16x96xf32>
    %19 = arith.mulf %18, %16 : vector<16x96xf32>
    %20 = arith.addf %14, %19 : vector<16x96xf32>
    %21 = arith.truncf %16 : vector<16x96xf32> to vector<16x96xbf16>
    %cst_13 = arith.constant dense<0.000000e+00> : vector<16x96xf32>
    %22 = tpu.matmul %8, %21, %cst_13 {dimension_numbers = #tpu.dot_dimension_numbers<[1], [0], [0], [1], [0, 0, 1, 1], [], []>} : vector<16x16xbf16>, vector<16x96xbf16>, vector<16x96xf32> -> vector<16x96xf32>
    %c3 = arith.constant 3 : index
    %c0_14 = arith.constant 0 : index
    %23 = vector.load %arg1[%c3, %c0_14] : memref<4x96xf32, #tpu.memory_space<vmem>>, vector<1x96xf32>
    %24 = vector.broadcast %23 : vector<1x96xf32> to vector<16x96xf32>
    %25 = arith.mulf %24, %22 : vector<16x96xf32>
    %26 = arith.addf %20, %25 : vector<16x96xf32>
    %c0_15 = arith.constant 0 : index
    %c0_16 = arith.constant 0 : index
    %c0_17 = arith.constant 0 : index
    %27 = vector.load %arg7[%c0_15, %c0_16, %c0_17] : memref<1x16x96xf32, #tpu.memory_space<vmem>>, vector<1x16x96xf32>
    %28 = vector.shape_cast %27 : vector<1x16x96xf32> to vector<16x96xf32>
    %29 = vector.shape_cast %26 : vector<16x96xf32> to vector<1x16x96xf32>
    tpu.vector_store %arg7[%c0_15, %c0_16, %c0_17], %29 {strides = array<i32>} : memref<1x16x96xf32, #tpu.memory_space<vmem>>, vector<1x16x96xf32>,
    %30 = arith.truncf %26 : vector<16x96xf32> to vector<16x96xbf16>
    %c0_18 = arith.constant 0 : index
    %c0_19 = arith.constant 0 : index
    %31 = vector.load %arg5[%c0_18, %c0_19] : memref<96x128xbf16, #tpu.memory_space<vmem>>, vector<96x128xbf16>
    %cst_20 = arith.constant dense<0.000000e+00> : vector<16x128xf32>
    %32 = tpu.matmul %30, %31, %cst_20 {dimension_numbers = #tpu.dot_dimension_numbers<[1], [0], [0], [1], [0, 0, 1, 1], [], []>} : vector<16x96xbf16>, vector<96x128xbf16>, vector<16x128xf32> -> vector<16x128xf32>
    %c0_21 = arith.constant 0 : index
    %c0_22 = arith.constant 0 : index
    %33 = vector.load %arg6[%c0_21, %c0_22] : memref<1x128xf32, #tpu.memory_space<vmem>>, vector<1x128xf32>
    %34 = vector.broadcast %33 : vector<1x128xf32> to vector<16x128xf32>
    %35 = arith.addf %32, %34 : vector<16x128xf32>
    %c0_23 = arith.constant 0 : index
    %c0_24 = arith.constant 0 : index
    %c0_25 = arith.constant 0 : index
    %36 = vector.load %arg8[%c0_23, %c0_24, %c0_25] : memref<1x16x128xf32, #tpu.memory_space<vmem>>, vector<1x16x128xf32>
    %37 = vector.shape_cast %36 : vector<1x16x128xf32> to vector<16x128xf32>
    %38 = vector.shape_cast %35 : vector<16x128xf32> to vector<1x16x128xf32>
    tpu.vector_store %arg8[%c0_23, %c0_24, %c0_25], %38 {strides = array<i32>} : memref<1x16x128xf32, #tpu.memory_space<vmem>>, vector<1x16x128xf32>,
    return
  }
  func.func @transform_0(%arg0: i32) -> (i32, i32) {
    %c0_i32 = arith.constant 0 : i32
    %c0_i32_0 = arith.constant 0 : i32
    %c0_i32_1 = arith.constant 0 : i32
    return %c0_i32, %c0_i32_0 : i32, i32
  }
  func.func @transform_1(%arg0: i32) -> (i32, i32, i32) {
    %c0_i32 = arith.constant 0 : i32
    %c0_i32_0 = arith.constant 0 : i32
    %c0_i32_1 = arith.constant 0 : i32
    return %arg0, %c0_i32, %c0_i32_0 : i32, i32, i32
  }
  func.func @transform_2(%arg0: i32) -> (i32, i32, i32) {
    %c0_i32 = arith.constant 0 : i32
    %c0_i32_0 = arith.constant 0 : i32
    %c0_i32_1 = arith.constant 0 : i32
    return %arg0, %c0_i32, %c0_i32_0 : i32, i32, i32
  }
  func.func @transform_3(%arg0: i32) -> (i32, i32) {
    %c0_i32 = arith.constant 0 : i32
    %c0_i32_0 = arith.constant 0 : i32
    %c0_i32_1 = arith.constant 0 : i32
    return %c0_i32, %c0_i32_0 : i32, i32
  }
  func.func @transform_4(%arg0: i32) -> (i32, i32) {
    %c0_i32 = arith.constant 0 : i32
    %c0_i32_0 = arith.constant 0 : i32
    %c0_i32_1 = arith.constant 0 : i32
    return %c0_i32, %c0_i32_0 : i32, i32
  }
  func.func @transform_5(%arg0: i32) -> (i32, i32) {
    %c0_i32 = arith.constant 0 : i32
    %c0_i32_0 = arith.constant 0 : i32
    %c0_i32_1 = arith.constant 0 : i32
    return %c0_i32, %c0_i32_0 : i32, i32
  }
  func.func @transform_6(%arg0: i32) -> (i32, i32, i32) {
    %c0_i32 = arith.constant 0 : i32
    %c0_i32_0 = arith.constant 0 : i32
    %c0_i32_1 = arith.constant 0 : i32
    return %arg0, %c0_i32, %c0_i32_0 : i32, i32, i32
  }
  func.func @transform_7(%arg0: i32) -> (i32, i32, i32) {
    %c0_i32 = arith.constant 0 : i32
    %c0_i32_0 = arith.constant 0 : i32
    %c0_i32_1 = arith.constant 0 : i32
    return %arg0, %c0_i32, %c0_i32_0 : i32, i32, i32
  }
}

</mosaic_0001>

<llo_original>
// kernel: tpu_custom_call.1
$region0: #{tpu_custom_call.1}
  #allocation0 [shape = 'u32[]', space=smem, size = 0x4, offset = 0x4, fixed_abs, tag = 'smem constant byte address 0x4 - core index']
  #allocation1 [shape = 'u32[72,128]{1,0:T(1,128)}', space=vmem, size = 0x9000, scoped, tag = 'internal scratch']
  %s0 = inlined_call_operand.hbm [shape: f32[4,96], index: 0, kind: input, shape index: {}]
  %s1 = inlined_call_operand.hbm [shape: bf16[4,16,16], index: 1, kind: input, shape index: {}]
  %s2 = inlined_call_operand.vmem [shape: bf16[4,16,8], index: 2, kind: input, shape index: {}]
  %s3 = inlined_call_operand.hbm [shape: bf16[8,96], index: 3, kind: input, shape index: {}]
  %s4 = inlined_call_operand.vmem [shape: bf16[96,128], index: 4, kind: input, shape index: {}]
  %s5 = inlined_call_operand.vmem [shape: f32[1,128], index: 5, kind: input, shape index: {}]
  %s6 = inlined_call_operand.hbm [shape: f32[4,16,96], index: 6, kind: output, shape index: {0}]
  %s7 = inlined_call_operand.hbm [shape: f32[4,16,128], index: 7, kind: output, shape index: {1}]
  %8 = xla_tuple %s6, %s7
  %s9 = sld [smem:[#allocation0]]
  $region77: #{tpu_custom_call.1} parent=0
    _
  %s11 = ssub.s32 1, %s9
  %s12 = scalar_select 0, %s11, %s9
  $region1: #{tpu_custom_call.1} parent=0
    #allocation2 [shape = 'u8[2048]{0}', space=vmem, size = 0x800, scoped, tag = 'input window, operand 0, single buffered']
    #allocation3 [shape = 's32[2]{0}', space=sflag, size = 0x8, scoped, tag = 'scoped memory for tpu_custom_call.1']
    #allocation4 [shape = 's32[2]{0}', space=sflag, size = 0x8, scoped, tag = 'scoped memory for tpu_custom_call.1']
    #allocation5 [shape = 'u8[8192]{0}', space=vmem, size = 0x2000, scoped, tag = 'input window, operand 1']
    #allocation6 [shape = 's32[2]{0}', space=sflag, size = 0x8, scoped, tag = 'scoped memory for tpu_custom_call.1']
    #allocation7 [shape = 'u8[2048]{0}', space=vmem, size = 0x800, scoped, tag = 'input window, operand 3, single buffered']
    #allocation8 [shape = 'u8[16384]{0}', space=vmem, size = 0x4000, scoped, tag = 'output window, operand 0']
    #allocation9 [shape = 'u8[16384]{0}', space=vmem, size = 0x4000, scoped, tag = 'output window, operand 1']
    #allocation10 [shape = 's32[2]{0}', space=sflag, size = 0x8, scoped, tag = 'scoped memory for tpu_custom_call.1']
    %13 = vsyncpa [#allocation3], 0
    %14 = vsyncpa [#allocation6], 0
    %s15 = scalar_lea.sflag [#allocation6], 1
    %16 = vsyncpa %s15, 0
    %17 = vsyncpa [#allocation4], 0
    %s18 = scalar_lea.sflag [#allocation4], 1
    %19 = vsyncpa %s18, 0
    %20 = vsyncpa [#allocation10], 0
    %s21 = scalar_lea.sflag [#allocation10], 1
    %22 = vsyncpa %s21, 0
    loop: start=0, step=1, limit=6
    $region2: #{tpu_custom_call.1} parent=1 // loop_pre_header
      _
    $region3: #{tpu_custom_call.1} parent=1 // loop_header
      %s24 = sphi 0, %s28
      %p25 = scmp.ge.s32.totalorder %s24, 6
      %s32 = sphi 0, %s32
      %s34 = sphi 0, %s32
      %s35 = sphi 0, %s34
      %s49 = sphi 0, %s35
      %s55 = sphi 0, %s57
      %s58 = sphi 0, %s55
      %s59 = sphi 0, %s58
      %s75 = sphi 0, %s59
      %s81 = sphi 0, %s83
      %s84 = sphi 0, %s81
      %s85 = sphi 0, %s84
      %s101 = sphi 0, %s85
      %s105 = sphi 0, %s105
      %s107 = sphi 0, %s105
      %s108 = sphi 0, %s107
      %s122 = sphi 0, %s108
      %s126 = sphi 0, %s126
      %s128 = sphi 0, %s126
      %s129 = sphi 0, %s128
      %s143 = sphi 0, %s129
      %s147 = sphi 0, %s147
      %s149 = sphi 0, %s147
      %s150 = sphi 0, %s149
      %s164 = sphi 0, %s150
      %s170 = sphi 0, %s172
      %s173 = sphi 0, %s170
      %s174 = sphi 0, %s173
      %s190 = sphi 0, %s174
      %s196 = sphi 0, %s198
      %s199 = sphi 0, %s196
      %s200 = sphi 0, %s199
      %s216 = sphi 0, %s200
    $region4: #{tpu_custom_call.1} parent=1 // loop_header_branch
      %27 = sbr.rel (%p25) target = $region8
    $region5: #{tpu_custom_call.1} parent=1 // loop_body
      %s29 = ssub.s32 %s24, 1
      %s30 = ssub.s32 %s24, 2
      %s31 = sadd.s32 %s24, 1
      %s33 = sadd.s32 %s32, 1
      %p36 = scmp.eq.s32.totalorder %s24, 3
      %p37 = scmp.ne.s32.totalorder %s32, %s34
      %p38 = scmp.eq.s32.totalorder %s24, 0
      %p39 = por %p37, %p38
      %p40 = scmp.ne.s32.totalorder %s32, %s34
      %p41 = scmp.eq.s32.totalorder %s29, 3
      %p42 = por %p40, %p41
      %p43 = scmp.ne.s32.totalorder %s34, %s35
      %p44 = scmp.eq.s32.totalorder %s29, 0
      %p45 = por %p43, %p44
      %p46 = scmp.ne.s32.totalorder %s34, %s35
      %p47 = scmp.eq.s32.totalorder %s30, 3
      %p48 = por %p46, %p47
      %p50 = scmp.ne.s32.totalorder %s35, %s49
      %p51 = scmp.eq.s32.totalorder %s30, 0
      %p52 = por %p50, %p51
      %s53 = ssub.s32 %s24, %s31
      %p54 = scmp.eq.s32.totalorder %s53, 0
      %s56 = sadd.s32 %s55, 1
      %s57 = scalar_select %p54, %s55, %s56
      %p60 = pneg %p54
      %p61 = scmp.eq.s32.totalorder %s24, 3
      %p62 = por %p60, %p61
      %p63 = scmp.ne.s32.totalorder %s55, %s58
      %p64 = scmp.eq.s32.totalorder %s24, 0
      %p65 = por %p63, %p64
      %p66 = scmp.ne.s32.totalorder %s55, %s58
      %p67 = scmp.eq.s32.totalorder %s29, 3
      %p68 = por %p66, %p67
      %p69 = scmp.ne.s32.totalorder %s58, %s59
      %p70 = scmp.eq.s32.totalorder %s29, 0
      %p71 = por %p69, %p70
      %p72 = scmp.ne.s32.totalorder %s58, %s59
      %p73 = scmp.eq.s32.totalorder %s30, 3
      %p74 = por %p72, %p73
      %p76 = scmp.ne.s32.totalorder %s59, %s75
      %p77 = scmp.eq.s32.totalorder %s30, 0
      %p78 = por %p76, %p77
      %s79 = ssub.s32 %s24, %s31
      %p80 = scmp.eq.s32.totalorder %s79, 0
      %s82 = sadd.s32 %s81, 1
      %s83 = scalar_select %p80, %s81, %s82
      %p86 = pneg %p80
      %p87 = scmp.eq.s32.totalorder %s24, 3
      %p88 = por %p86, %p87
      %p89 = scmp.ne.s32.totalorder %s81, %s84
      %p90 = scmp.eq.s32.totalorder %s24, 0
      %p91 = por %p89, %p90
      %p92 = scmp.ne.s32.totalorder %s81, %s84
      %p93 = scmp.eq.s32.totalorder %s29, 3
      %p94 = por %p92, %p93
      %p95 = scmp.ne.s32.totalorder %s84, %s85
      %p96 = scmp.eq.s32.totalorder %s29, 0
      %p97 = por %p95, %p96
      %p98 = scmp.ne.s32.totalorder %s84, %s85
      %p99 = scmp.eq.s32.totalorder %s30, 3
      %p100 = por %p98, %p99
      %p102 = scmp.ne.s32.totalorder %s85, %s101
      %p103 = scmp.eq.s32.totalorder %s30, 0
      %p104 = por %p102, %p103
      %s106 = sadd.s32 %s105, 1
      %p109 = scmp.eq.s32.totalorder %s24, 3
      %p110 = scmp.ne.s32.totalorder %s105, %s107
      %p111 = scmp.eq.s32.totalorder %s24, 0
      %p112 = por %p110, %p111
      %p113 = scmp.ne.s32.totalorder %s105, %s107
      %p114 = scmp.eq.s32.totalorder %s29, 3
      %p115 = por %p113, %p114
      %p116 = scmp.ne.s32.totalorder %s107, %s108
      %p117 = scmp.eq.s32.totalorder %s29, 0
      %p118 = por %p116, %p117
      %p119 = scmp.ne.s32.totalorder %s107, %s108
      %p120 = scmp.eq.s32.totalorder %s30, 3
      %p121 = por %p119, %p120
      %p123 = scmp.ne.s32.totalorder %s108, %s122
      %p124 = scmp.eq.s32.totalorder %s30, 0
      %p125 = por %p123, %p124
      %s127 = sadd.s32 %s126, 1
      %p130 = scmp.eq.s32.totalorder %s24, 3
      %p131 = scmp.ne.s32.totalorder %s126, %s128
      %p132 = scmp.eq.s32.totalorder %s24, 0
      %p133 = por %p131, %p132
      %p134 = scmp.ne.s32.totalorder %s126, %s128
      %p135 = scmp.eq.s32.totalorder %s29, 3
      %p136 = por %p134, %p135
      %p137 = scmp.ne.s32.totalorder %s128, %s129
      %p138 = scmp.eq.s32.totalorder %s29, 0
      %p139 = por %p137, %p138
      %p140 = scmp.ne.s32.totalorder %s128, %s129
      %p141 = scmp.eq.s32.totalorder %s30, 3
      %p142 = por %p140, %p141
      %p144 = scmp.ne.s32.totalorder %s129, %s143
      %p145 = scmp.eq.s32.totalorder %s30, 0
      %p146 = por %p144, %p145
      %s148 = sadd.s32 %s147, 1
      %p151 = scmp.eq.s32.totalorder %s24, 3
      %p152 = scmp.ne.s32.totalorder %s147, %s149
      %p153 = scmp.eq.s32.totalorder %s24, 0
      %p154 = por %p152, %p153
      %p155 = scmp.ne.s32.totalorder %s147, %s149
      %p156 = scmp.eq.s32.totalorder %s29, 3
      %p157 = por %p155, %p156
      %p158 = scmp.ne.s32.totalorder %s149, %s150
      %p159 = scmp.eq.s32.totalorder %s29, 0
      %p160 = por %p158, %p159
      %p161 = scmp.ne.s32.totalorder %s149, %s150
      %p162 = scmp.eq.s32.totalorder %s30, 3
      %p163 = por %p161, %p162
      %p165 = scmp.ne.s32.totalorder %s150, %s164
      %p166 = scmp.eq.s32.totalorder %s30, 0
      %p167 = por %p165, %p166
      %s168 = ssub.s32 %s24, %s31
      %p169 = scmp.eq.s32.totalorder %s168, 0
      %s171 = sadd.s32 %s170, 1
      %s172 = scalar_select %p169, %s170, %s171
      %p175 = pneg %p169
      %p176 = scmp.eq.s32.totalorder %s24, 3
      %p177 = por %p175, %p176
      %p178 = scmp.ne.s32.totalorder %s170, %s173
      %p179 = scmp.eq.s32.totalorder %s24, 0
      %p180 = por %p178, %p179
      %p181 = scmp.ne.s32.totalorder %s170, %s173
      %p182 = scmp.eq.s32.totalorder %s29, 3
      %p183 = por %p181, %p182
      %p184 = scmp.ne.s32.totalorder %s173, %s174
      %p185 = scmp.eq.s32.totalorder %s29, 0
      %p186 = por %p184, %p185
      %p187 = scmp.ne.s32.totalorder %s173, %s174
      %p188 = scmp.eq.s32.totalorder %s30, 3
      %p189 = por %p187, %p188
      %p191 = scmp.ne.s32.totalorder %s174, %s190
      %p192 = scmp.eq.s32.totalorder %s30, 0
      %p193 = por %p191, %p192
      %s194 = ssub.s32 %s24, %s31
      %p195 = scmp.eq.s32.totalorder %s194, 0
      %s197 = sadd.s32 %s196, 1
      %s198 = scalar_select %p195, %s196, %s197
      %p201 = pneg %p195
      %p202 = scmp.eq.s32.totalorder %s24, 3
      %p203 = por %p201, %p202
      %p204 = scmp.ne.s32.totalorder %s196, %s199
      %p205 = scmp.eq.s32.totalorder %s24, 0
      %p206 = por %p204, %p205
      %p207 = scmp.ne.s32.totalorder %s196, %s199
      %p208 = scmp.eq.s32.totalorder %s29, 3
      %p209 = por %p207, %p208
      %p210 = scmp.ne.s32.totalorder %s199, %s200
      %p211 = scmp.eq.s32.totalorder %s29, 0
      %p212 = por %p210, %p211
      %p213 = scmp.ne.s32.totalorder %s199, %s200
      %p214 = scmp.eq.s32.totalorder %s30, 3
      %p215 = por %p213, %p214
      %p217 = scmp.ne.s32.totalorder %s200, %s216
      %p218 = scmp.eq.s32.totalorder %s30, 0
      %p219 = por %p217, %p218
      %p220 = scmp.le.s32.totalorder 1, %s24
      %p221 = scmp.lt.s32.totalorder %s24, 5
      %p222 = pnand %p220, %p221
      %p223 = pneg %p222
      // Predicated region
      $region9: #{tpu_custom_call.1} parent=5 // pred_check
        _
      $region10: #{tpu_custom_call.1} parent=5 // pred_check_branch
        %225 = sbr.rel (%p222) target = $region12
      $region11: #{tpu_custom_call.1} parent=5 // pred_region
        %s226 = ssub.s32 %s24, 1
        // Predicated region
        $region13: #{tpu_custom_call.1} parent=11 // pred_check
          %p227 = pneg %p45
        $region14: #{tpu_custom_call.1} parent=11 // pred_check_branch
          %229 = sbr.rel (%p227) target = $region16
        $region15: #{tpu_custom_call.1} parent=11 // pred_region
          %231 = vsyncadd [#allocation3], 0
          %s233 = sshll.u32 %s0, 4
          %s234 = int_to_ptr.hbm [resolvable:$true] %s233
          %s235 = sshll.u32 [#allocation2], 4
          %s236 = int_to_ptr.vmem [resolvable:$true] %s235
          %238 = dma.hbm_to_vmem [thread:$0]  %s234, 64, %s236, [#allocation3]
        $region16: #{tpu_custom_call.1} parent=11 // pred_fallthru
          _
        // Predicated region
        $region17: #{tpu_custom_call.1} parent=11 // pred_check
          %p239 = pneg %p118
        $region18: #{tpu_custom_call.1} parent=11 // pred_check_branch
          %241 = sbr.rel (%p239) target = $region20
        $region19: #{tpu_custom_call.1} parent=11 // pred_region
          %243 = vsyncadd [#allocation6], 0
          %s245 = sshll.u32 %s3, 4
          %s246 = int_to_ptr.hbm [resolvable:$true] %s245
          %s247 = sshll.u32 [#allocation7], 4
          %s248 = int_to_ptr.vmem [resolvable:$true] %s247
          %250 = dma.hbm_to_vmem [thread:$0]  %s246, 64, %s248, [#allocation6]
        $region20: #{tpu_custom_call.1} parent=11 // pred_fallthru
          _
        // Predicated region
        $region21: #{tpu_custom_call.1} parent=11 // pred_check
          %p251 = pneg %p139
        $region22: #{tpu_custom_call.1} parent=11 // pred_check_branch
          %253 = sbr.rel (%p251) target = $region24
        $region23: #{tpu_custom_call.1} parent=11 // pred_region
          _
        $region24: #{tpu_custom_call.1} parent=11 // pred_fallthru
          _
        // Predicated region
        $region25: #{tpu_custom_call.1} parent=11 // pred_check
          %p254 = pneg %p160
        $region26: #{tpu_custom_call.1} parent=11 // pred_check_branch
          %256 = sbr.rel (%p254) target = $region28
        $region27: #{tpu_custom_call.1} parent=11 // pred_region
          _
        $region28: #{tpu_custom_call.1} parent=11 // pred_fallthru
          _
      $region12: #{tpu_custom_call.1} parent=5 // pred_fallthru
        _
      %p257 = scmp.lt.s32.totalorder %s24, 4
      // Predicated region
      $region29: #{tpu_custom_call.1} parent=5 // pred_check
        %p258 = pneg %p257
      $region30: #{tpu_custom_call.1} parent=5 // pred_check_branch
        %260 = sbr.rel (%p258) target = $region32
      $region31: #{tpu_custom_call.1} parent=5 // pred_region
        // Predicated region
        $region33: #{tpu_custom_call.1} parent=31 // pred_check
          %p261 = pneg %p65
        $region34: #{tpu_custom_call.1} parent=31 // pred_check_branch
          %263 = sbr.rel (%p261) target = $region36
        $region35: #{tpu_custom_call.1} parent=31 // pred_region
          %s264 = sand.u32 %s24, 1
          %s265 = scalar_lea.sflag [#allocation6], %s264
          %s266 = sand.u32 %s55, 1
          %s267 = smul.addr %s266, 8
          %s268 = scalar_lea.vmem [#allocation5], %s267
          %270 = vsyncadd %s265, 0
          %s271 = smul.addr %s24, 2
          %s272 = smul.addr %s271, 4
          %s273 = scalar_lea.hbm %s1, %s272
          %s274 = sshll.u32 %s273, 4
          %s275 = int_to_ptr.hbm [resolvable:$true] %s274
          %s276 = sshll.u32 %s268, 4
          %s277 = int_to_ptr.vmem [resolvable:$true] %s276
          %282 = dma.hbm_to_vmem [thread:$0]  %s275, 128, %s277, %s265, 64, 64, 4
        $region36: #{tpu_custom_call.1} parent=31 // pred_fallthru
          _
        // Predicated region
        $region37: #{tpu_custom_call.1} parent=31 // pred_check
          %p283 = pneg %p91
        $region38: #{tpu_custom_call.1} parent=31 // pred_check_branch
          %285 = sbr.rel (%p283) target = $region40
        $region39: #{tpu_custom_call.1} parent=31 // pred_region
          %p286 = scmp.lt.s32.totalorder %s24, 3
          %s287 = scalar_select %p286, %s24, 3
          %s288 = smul.addr %s287, 2
          %s289 = smul.addr %s288, 4
          %s290 = scalar_lea.vmem %s2, %s289
        $region40: #{tpu_custom_call.1} parent=31 // pred_fallthru
          _
      $region32: #{tpu_custom_call.1} parent=5 // pred_fallthru
        _
      %p291 = scmp.le.s32.totalorder 1, %s24
      %p292 = scmp.lt.s32.totalorder %s24, 5
      %p293 = pnand %p291, %p292
      %p294 = pneg %p293
      // Predicated region
      $region41: #{tpu_custom_call.1} parent=5 // pred_check
        _
      $region42: #{tpu_custom_call.1} parent=5 // pred_check_branch
        %296 = sbr.rel (%p293) target = $region44
      $region43: #{tpu_custom_call.1} parent=5 // pred_region
        %s297 = ssub.s32 %s24, 1
        // Predicated region
        $region45: #{tpu_custom_call.1} parent=43 // pred_check
          %p298 = pneg %p45
        $region46: #{tpu_custom_call.1} parent=43 // pred_check_branch
          %300 = sbr.rel (%p298) target = $region48
        $region47: #{tpu_custom_call.1} parent=43 // pred_region
          %302 = dma.done [#allocation3], 64
        $region48: #{tpu_custom_call.1} parent=43 // pred_fallthru
          _
        %s303 = sand.u32 %s29, 1
        %s304 = scalar_lea.sflag [#allocation6], %s303
        %s305 = sand.u32 %s58, 1
        %s306 = smul.addr %s305, 8
        %s307 = scalar_lea.vmem [#allocation5], %s306
        // Predicated region
        $region49: #{tpu_custom_call.1} parent=43 // pred_check
          %p308 = pneg %p71
        $region50: #{tpu_custom_call.1} parent=43 // pred_check_branch
          %310 = sbr.rel (%p308) target = $region52
        $region51: #{tpu_custom_call.1} parent=43 // pred_region
          %312 = dma.done %s304, 128
        $region52: #{tpu_custom_call.1} parent=43 // pred_fallthru
          _
        // Predicated region
        $region53: #{tpu_custom_call.1} parent=43 // pred_check
          %p313 = pneg %p118
        $region54: #{tpu_custom_call.1} parent=43 // pred_check_branch
          %315 = sbr.rel (%p313) target = $region56
        $region55: #{tpu_custom_call.1} parent=43 // pred_region
          %317 = dma.done [#allocation6], 64
        $region56: #{tpu_custom_call.1} parent=43 // pred_fallthru
          _
        %p318 = pneg %p45
        %p319 = pneg %p42
        %s320 = sand.u32 %s29, 1
        %s321 = scalar_lea.sflag [#allocation6], %s320
        %s322 = sand.u32 %s58, 1
        %s323 = smul.addr %s322, 8
        %s324 = scalar_lea.vmem [#allocation5], %s323
        %p325 = pneg %p71
        %p326 = pneg %p68
        %p327 = scmp.lt.s32.totalorder %s29, 3
        %s328 = scalar_select %p327, %s29, 3
        %s329 = smul.addr %s328, 2
        %s330 = smul.addr %s329, 4
        %s331 = scalar_lea.vmem %s2, %s330
        %p332 = pneg %p97
        %p333 = pneg %p94
        %p334 = pneg %p118
        %p335 = pneg %p115
        %p336 = pneg %p139
        %p337 = pneg %p136
        %p338 = pneg %p160
        %p339 = pneg %p157
        %p340 = pneg %p186
        %p341 = pneg %p183
        %s342 = sand.u32 %s173, 1
        %s343 = scalar_lea.sflag [#allocation4], %s342
        %s344 = sand.u32 %s173, 1
        %s345 = smul.addr %s344, 16
        %s346 = scalar_lea.vmem [#allocation8], %s345
        %p347 = pneg %p212
        %p348 = pneg %p209
        %s349 = sand.u32 %s199, 1
        %s350 = scalar_lea.sflag [#allocation10], %s349
        %s351 = sand.u32 %s199, 1
        %s352 = smul.addr %s351, 16
        %s353 = scalar_lea.vmem [#allocation9], %s352
        %p354 = scmp.lt.s32.totalorder %s29, 3
        %s355 = scalar_select %p354, %s29, 3
        %s356 = smul.addr %s355, 2
        %s357 = smul.addr %s356, 4
        %s358 = scalar_lea.vmem %s2, %s357
        %v360 = vld [vmem:[%s358] sm:$0xf]
        %v361 = vld [vmem:[%s358 + $0x4] sm:$0xf]
        %v362 = vld [vmem:[#allocation7] sm:$0xf]
        %v365 = vunpack.c.l.b16 %v360
        %v366 = vunpack.c.l.b16 %v361
        %v367 = vpack.c.b16 %v366, %v365
        %vm368 = vcmask 64512
        %v370 = vsel %vm368, %v367, 0
        %vm372 = vcmask 1043456
        %v374 = vsel %vm372, %v362, 0
        %376 = vmatpush.bf16.msra.mxu0 0
        %377 = vmatpush.bf16.msra.mxu0 0
        %378 = vmatpush.bf16.msra.mxu0 0
        %379 = vmatpush.bf16.msra.mxu0 0
        %380 = vmatpush.bf16.msra.mxu0 0
        %381 = vmatpush.bf16.msra.mxu0 0
        %382 = vmatpush.bf16.msra.mxu0 0
        %383 = vmatpush.bf16.msra.mxu0 %v374
        %384 = vmatmul.bf16.gmra.mxu0 %v370
        %v385 = vpop.f32.mrf.mxu0
        %v386 = vadd.f32 0.0, %v385
        %v387 = vpop.f32.mrf.mxu0
        %v388 = vadd.f32 0.0, %v387
        %389 = vdwg.mxu0
        %v390 = vld [vmem:[#allocation2] sm:$0x1]
        %v391 = vperm.slane %v390, 0
        %v392 = vmul.f32 %v391, %v386
        %v393 = vmul.f32 %v391, %v388
        %v394 = vld [vmem:[%s307] sm:$0xf]
        %v395 = vld [vmem:[%s307 + $0x4] sm:$0xf]
        %v396 = vpack.c.bf16 %v388, %v386
        %v399 = vunpack.c.l.b16 %v394
        %v400 = vunpack.c.l.b16 %v395
        %v401 = vpack.c.b16 %v400, %v399
        %vm402 = vcmask 130048
        %v404 = vsel %vm402, %v401, 0
        %406 = vmatpush.bf16.msra.mxu0 0
        %407 = vmatpush.bf16.msra.mxu0 0
        %408 = vmatpush.bf16.msra.mxu0 0
        %409 = vmatpush.bf16.msra.mxu0 0
        %410 = vmatpush.bf16.msra.mxu0 0
        %411 = vmatpush.bf16.msra.mxu0 0
        %412 = vmatpush.bf16.msra.mxu0 0
        %413 = vmatpush.bf16.msra.mxu0 %v396
        %414 = vmatmul.bf16.gmra.mxu0 %v404
        %v415 = vpop.f32.mrf.mxu0
        %v416 = vadd.f32 0.0, %v415
        %v417 = vpop.f32.mrf.mxu0
        %v418 = vadd.f32 0.0, %v417
        %419 = vdwg.mxu0
        %v420 = vld [vmem:[#allocation2 + $0x1] sm:$0x1]
        %v421 = vperm.slane %v420, 0
        %v422 = vmul.f32 %v421, %v416
        %v423 = vmul.f32 %v421, %v418
        %v424 = vadd.f32 %v392, %v422
        %v425 = vadd.f32 %v393, %v423
        %v426 = vpack.c.bf16 %v418, %v416
        %427 = vmatpush.bf16.msra.mxu0 0
        %428 = vmatpush.bf16.msra.mxu0 0
        %429 = vmatpush.bf16.msra.mxu0 0
        %430 = vmatpush.bf16.msra.mxu0 0
        %431 = vmatpush.bf16.msra.mxu0 0
        %432 = vmatpush.bf16.msra.mxu0 0
        %433 = vmatpush.bf16.msra.mxu0 0
        %434 = vmatpush.bf16.msra.mxu0 %v426
        %435 = vmatmul.bf16.gmra.mxu0 %v404
        %v436 = vpop.f32.mrf.mxu0
        %v437 = vadd.f32 0.0, %v436
        %v438 = vpop.f32.mrf.mxu0
        %v439 = vadd.f32 0.0, %v438
        %440 = vdwg.mxu0
        %v441 = vld [vmem:[#allocation2 + $0x2] sm:$0x1]
        %v442 = vperm.slane %v441, 0
        %v443 = vmul.f32 %v442, %v437
        %v444 = vmul.f32 %v442, %v439
        %v445 = vadd.f32 %v424, %v443
        %v446 = vadd.f32 %v425, %v444
        %v447 = vpack.c.bf16 %v439, %v437
        %448 = vmatpush.bf16.msra.mxu0 0
        %449 = vmatpush.bf16.msra.mxu0 0
        %450 = vmatpush.bf16.msra.mxu0 0
        %451 = vmatpush.bf16.msra.mxu0 0
        %452 = vmatpush.bf16.msra.mxu0 0
        %453 = vmatpush.bf16.msra.mxu0 0
        %454 = vmatpush.bf16.msra.mxu0 0
        %455 = vmatpush.bf16.msra.mxu0 %v447
        %456 = vmatmul.bf16.gmra.mxu0 %v404
        %v457 = vpop.f32.mrf.mxu0
        %v458 = vadd.f32 0.0, %v457
        %v459 = vpop.f32.mrf.mxu0
        %v460 = vadd.f32 0.0, %v459
        %461 = vdwg.mxu0
        %v462 = vld [vmem:[#allocation2 + $0x3] sm:$0x1]
        %v463 = vperm.slane %v462, 0
        %v464 = vmul.f32 %v463, %v458
        %v465 = vmul.f32 %v463, %v460
        %v466 = vadd.f32 %v445, %v464
        %v467 = vadd.f32 %v446, %v465
        %vm468 = vcmask 785408
        %469 = vst.msk [vmem:[%s346] sm:$0xff] %vm468, %v466
        %470 = vst.msk [vmem:[%s346 + $0x8] sm:$0xff] %vm468, %v467
        %v471 = vpack.c.bf16 %v467, %v466
        %v472 = vld [vmem:[%s4] sm:$0xf]
        %v473 = vld [vmem:[%s4 + $0x4] sm:$0xf]
        %v474 = vld [vmem:[%s4 + $0x8] sm:$0xf]
        %v475 = vld [vmem:[%s4 + $0xc] sm:$0xf]
        %v476 = vld [vmem:[%s4 + $0x10] sm:$0xf]
        %v477 = vld [vmem:[%s4 + $0x14] sm:$0xf]
        %v478 = vld [vmem:[%s4 + $0x18] sm:$0xf]
        %v479 = vld [vmem:[%s4 + $0x1c] sm:$0xf]
        %v480 = vld [vmem:[%s4 + $0x20] sm:$0xf]
        %v481 = vld [vmem:[%s4 + $0x24] sm:$0xf]
        %v482 = vld [vmem:[%s4 + $0x28] sm:$0xf]
        %v483 = vld [vmem:[%s4 + $0x2c] sm:$0xf]
        %v484 = vld [vmem:[%s5] sm:$0x1]
        %v486 = vperm.slane %v484, 0
        %v500 = vunpack.c.l.b16 %v472
        %v501 = vunpack.c.l.b16 %v473
        %v502 = vunpack.c.l.b16 %v474
        %v503 = vunpack.c.l.b16 %v475
        %v504 = vunpack.c.l.b16 %v476
        %v505 = vunpack.c.l.b16 %v477
        %v506 = vunpack.c.l.b16 %v478
        %v507 = vunpack.c.l.b16 %v479
        %v508 = vunpack.c.l.b16 %v480
        %v509 = vunpack.c.l.b16 %v481
        %v510 = vunpack.c.l.b16 %v482
        %v511 = vunpack.c.l.b16 %v483
        %v512 = vpack.c.b16 %v501, %v500
        %v513 = vpack.c.b16 %v503, %v502
        %v514 = vpack.c.b16 %v505, %v504
        %v515 = vpack.c.b16 %v507, %v506
        %v516 = vpack.c.b16 %v509, %v508
        %v517 = vpack.c.b16 %v511, %v510
        %v525 = vsel %vm468, %v471, 0
        %527 = vmatpush.bf16.msra.mxu0 0
        %528 = vmatpush.bf16.msra.mxu0 0
        %529 = vmatpush.bf16.msra.mxu0 %v517
        %530 = vmatpush.bf16.msra.mxu0 %v516
        %531 = vmatpush.bf16.msra.mxu0 %v515
        %532 = vmatpush.bf16.msra.mxu0 %v514
        %533 = vmatpush.bf16.msra.mxu0 %v513
        %534 = vmatpush.bf16.msra.mxu0 %v512
        %535 = vmatmul.bf16.gmra.mxu0 %v525
        %v536 = vpop.f32.mrf.mxu0
        %v537 = vadd.f32 %v486, %v536
        %v538 = vpop.f32.mrf.mxu0
        %v539 = vadd.f32 %v486, %v538
        %540 = vdwg.mxu0
        %541 = vst [vmem:[%s353] sm:$0xff] %v537
        %542 = vst [vmem:[%s353 + $0x8] sm:$0xff] %v539
        %s543 = sand.u32 %s173, 1
        %s544 = scalar_lea.sflag [#allocation4], %s543
        %s545 = sand.u32 %s173, 1
        %s546 = smul.addr %s545, 16
        %s547 = scalar_lea.vmem [#allocation8], %s546
        %s548 = sand.u32 %s199, 1
        %s549 = scalar_lea.sflag [#allocation10], %s548
        %s550 = sand.u32 %s199, 1
        %s551 = smul.addr %s550, 16
        %s552 = scalar_lea.vmem [#allocation9], %s551
        // Predicated region
        $region57: #{tpu_custom_call.1} parent=43 // pred_check
          %p553 = pneg %p183
        $region58: #{tpu_custom_call.1} parent=43 // pred_check_branch
          %555 = sbr.rel (%p553) target = $region60
        $region59: #{tpu_custom_call.1} parent=43 // pred_region
          %557 = vsyncadd %s544, 0
          %s558 = smul.addr %s29, 2
          %s559 = smul.addr %s558, 8
          %s560 = scalar_lea.hbm %s6, %s559
          %s561 = sshll.u32 %s547, 4
          %s562 = int_to_ptr.vmem [resolvable:$true] %s561
          %s563 = sshll.u32 %s560, 4
          %s564 = int_to_ptr.hbm [resolvable:$true] %s563
          %569 = dma.vmem_to_hbm [thread:$0]  %s562, 256, %s564, %s544, 128, 128, 8
        $region60: #{tpu_custom_call.1} parent=43 // pred_fallthru
          _
        // Predicated region
        $region61: #{tpu_custom_call.1} parent=43 // pred_check
          %p570 = pneg %p209
        $region62: #{tpu_custom_call.1} parent=43 // pred_check_branch
          %572 = sbr.rel (%p570) target = $region64
        $region63: #{tpu_custom_call.1} parent=43 // pred_region
          %574 = vsyncadd %s549, 0
          %s575 = smul.addr %s29, 2
          %s576 = smul.addr %s575, 8
          %s577 = scalar_lea.hbm %s7, %s576
          %s578 = sshll.u32 %s552, 4
          %s579 = int_to_ptr.vmem [resolvable:$true] %s578
          %s580 = sshll.u32 %s577, 4
          %s581 = int_to_ptr.hbm [resolvable:$true] %s580
          %586 = dma.vmem_to_hbm [thread:$0]  %s579, 256, %s581, %s549, 128, 128, 8
        $region64: #{tpu_custom_call.1} parent=43 // pred_fallthru
          _
      $region44: #{tpu_custom_call.1} parent=5 // pred_fallthru
        _
      %p587 = scmp.le.s32.totalorder 2, %s24
      // Predicated region
      $region65: #{tpu_custom_call.1} parent=5 // pred_check
        %p588 = pneg %p587
      $region66: #{tpu_custom_call.1} parent=5 // pred_check_branch
        %590 = sbr.rel (%p588) target = $region68
      $region67: #{tpu_custom_call.1} parent=5 // pred_region
        %s591 = ssub.s32 %s24, 2
        // Predicated region
        $region69: #{tpu_custom_call.1} parent=67 // pred_check
          %p592 = pneg %p189
        $region70: #{tpu_custom_call.1} parent=67 // pred_check_branch
          %594 = sbr.rel (%p592) target = $region72
        $region71: #{tpu_custom_call.1} parent=67 // pred_region
          %s595 = sand.u32 %s174, 1
          %s596 = scalar_lea.sflag [#allocation4], %s595
          %s597 = sand.u32 %s174, 1
          %s598 = smul.addr %s597, 16
          %s599 = scalar_lea.vmem [#allocation8], %s598
          %601 = dma.done %s596, 256
        $region72: #{tpu_custom_call.1} parent=67 // pred_fallthru
          _
        // Predicated region
        $region73: #{tpu_custom_call.1} parent=67 // pred_check
          %p602 = pneg %p215
        $region74: #{tpu_custom_call.1} parent=67 // pred_check_branch
          %604 = sbr.rel (%p602) target = $region76
        $region75: #{tpu_custom_call.1} parent=67 // pred_region
          %s605 = sand.u32 %s200, 1
          %s606 = scalar_lea.sflag [#allocation10], %s605
          %s607 = sand.u32 %s200, 1
          %s608 = smul.addr %s607, 16
          %s609 = scalar_lea.vmem [#allocation9], %s608
          %611 = dma.done %s606, 256
        $region76: #{tpu_custom_call.1} parent=67 // pred_fallthru
          _
      $region68: #{tpu_custom_call.1} parent=5 // pred_fallthru
        _
    $region6: #{tpu_custom_call.1} parent=1 // loop_footer
      %s28 = sadd.s32 1, %s24
    $region7: #{tpu_custom_call.1} parent=1 // loop_footer_branch
      %23 = sbr.rel target = $region3
    $region8: #{tpu_custom_call.1} parent=1 // loop_exit
      _
    %612 = vsyncpa [#allocation3], 1
    %s613 = scalar_lea.sflag [#allocation3], 1
    %614 = vsyncpa %s613, 1
    %615 = vsyncpa [#allocation6], 1
    %s616 = scalar_lea.sflag [#allocation6], 1
    %617 = vsyncpa %s616, 1
    %618 = vsyncpa [#allocation4], 1
    %s619 = scalar_lea.sflag [#allocation4], 1
    %620 = vsyncpa %s619, 1
    %621 = vsyncpa [#allocation10], 1
    %s622 = scalar_lea.sflag [#allocation10], 1
    %623 = vsyncpa %s622, 1

</llo_original>
